<compile_context>
chip_gen: v7x
topology: tpu7x:2x2x1
jax: 0.10.0
libtpu: 0.0.40
codegen_flags: <defaults>
</compile_context>

<pallas_src>
import functools

import jax
import jax.numpy as jnp
from jax.experimental import pallas as pl
from jax.experimental.pallas import tpu as pltpu


def channel_attention_kernel(x_ref, w1_ref, w2_ref, o_ref, *, inv_hw: float):
    """x_ref: (Bt, C, HW); w1_ref: (neck, C) = fc1.weight; w2_ref: (C, neck) = fc2.weight."""
    x = x_ref[...]                                           # (Bt, C, HW), input dtype

    # Spatial pooling over the lane axis (XLU).  Sum accumulates in f32 for
    # bf16 safety; max is exact in the input dtype.  Mosaic masks the ragged
    # lane tail when HW is not a multiple of 128, so no explicit mask needed.
    avg = jnp.sum(x.astype(jnp.float32), axis=-1) * inv_hw   # (Bt, C) f32
    mx = jnp.max(x, axis=-1).astype(jnp.float32)             # (Bt, C) f32

    # Fuse both MLP branches for all Bt images: rows [0:Bt) = avg, [Bt:2Bt) = max.
    pooled = jnp.concatenate([avg, mx], axis=0)              # (2*Bt, C) f32

    w1 = w1_ref[...].astype(jnp.float32)                     # (neck, C)
    w2 = w2_ref[...].astype(jnp.float32)                     # (C, neck)

    # h = relu(pooled @ W1^T); y = h @ W2^T   -> two MXU matmuls per grid step.
    h = jnp.maximum(
        jax.lax.dot_general(pooled, w1, (((1,), (1,)), ((), ())),
                            preferred_element_type=jnp.float32),
        0.0)                                                 # (2*Bt, neck)
    y = jax.lax.dot_general(h, w2, (((1,), (1,)), ((), ())),
                            preferred_element_type=jnp.float32)  # (2*Bt, C)

    bt = x.shape[0]
    att = jax.nn.sigmoid(y[:bt] + y[bt:])                    # (Bt, C) f32

    # Broadcast-multiply over the spatial axis in the INPUT dtype (no full-tile
    # f32 temporary kept live through the store).
    o_ref[...] = x * att[..., None].astype(x.dtype)


def _choose_batch_tile(B: int, per_batch_bytes: int, target_bytes: int = 2 << 20) -> int:
    """Largest divisor of B giving ~target-sized blocks while keeping >=2 (even) grid steps."""
    divisors = [d for d in range(1, B + 1) if B % d == 0]
    fit = [d for d in divisors if d * per_batch_bytes <= target_bytes] or [1]
    # Prefer keeping at least two grid steps (feeds both v7x TensorCores).
    pref = [d for d in fit if B // d >= 2] or fit
    # Among those, prefer an even step count.
    even = [d for d in pref if (B // d) % 2 == 0]
    return max(even) if even else max(pref)


def _vmem_limit_bytes(block_bytes: int, weight_bytes: int) -> int:
    # 2x double-buffered input + output blocks, double-buffered weights,
    # ~1 block worth of in-kernel temporaries, plus slack.
    needed = 4 * block_bytes + 2 * weight_bytes + block_bytes + (2 << 20)
    cap = 48 << 20                      # safe default for v7x (64 MiB physical / TC)
    try:
        info = pltpu.get_tpu_info()
        cap = int(0.75 * int(info.vmem_capacity_bytes))   # ~96 MiB on v5e/v6e
    except Exception:
        pass
    return int(min(max(needed, 16 << 20), cap))


def channel_attention(x, fc1_weight, fc2_weight):
    """x: (B, C, H, W); fc1_weight: (neck, C); fc2_weight: (C, neck). Returns (B, C, H, W)."""
    B, C, H, W = x.shape
    neck = fc1_weight.shape[0]
    HW = H * W
    itemsize = x.dtype.itemsize

    x3 = x.reshape(B, C, HW)            # no padding: last two dims stay full-extent

    per_batch_bytes = C * HW * itemsize
    bt = _choose_batch_tile(B, per_batch_bytes)
    grid_steps = B // bt

    block_bytes = bt * per_batch_bytes
    weight_bytes = (fc1_weight.size * fc1_weight.dtype.itemsize
                    + fc2_weight.size * fc2_weight.dtype.itemsize)
    vmem_bytes = _vmem_limit_bytes(block_bytes, weight_bytes)

    flops = int(B * (3 * C * HW + 8 * neck * C))
    bytes_accessed = int(2 * B * C * HW * itemsize + weight_bytes)

    kernel = functools.partial(channel_attention_kernel, inv_hw=1.0 / HW)

    out = pl.pallas_call(
        kernel,
        out_shape=jax.ShapeDtypeStruct((B, C, HW), x.dtype),
        grid=(grid_steps,),
        in_specs=[
            # Last two dims equal the full array dims -> legal even when HW % 128 != 0.
            pl.BlockSpec((bt, C, HW), lambda b: (b, 0, 0)),
            pl.BlockSpec(fc1_weight.shape, lambda b: (0, 0)),
            pl.BlockSpec(fc2_weight.shape, lambda b: (0, 0)),
        ],
        out_specs=pl.BlockSpec((bt, C, HW), lambda b: (b, 0, 0)),
        compiler_params=pltpu.CompilerParams(
            dimension_semantics=("parallel",),
            vmem_limit_bytes=vmem_bytes,
        ),
        cost_estimate=pl.CostEstimate(
            flops=flops,
            transcendentals=int(B * C),
            bytes_accessed=bytes_accessed,
        ),
    )(x3, fc1_weight, fc2_weight)

    return out.reshape(B, C, H, W)


def _reference(x, fc1_weight, fc2_weight):
    """Pure-JAX reference mirroring the PyTorch forward."""
    def body(v):
        return jnp.maximum(v @ fc1_weight.T, 0.0) @ fc2_weight.T
    avg = jnp.mean(x, axis=(2, 3))
    mx = jnp.max(x, axis=(2, 3))
    att = jax.nn.sigmoid(body(avg) + body(mx))[..., None, None]
    return x * att


if __name__ == "__main__":
    # Module config: channels=32, reduction=4 -> neck=8, bias=False.
    B, C, H, W = 2, 32, 16, 16
    reduction = 4
    neck = C // reduction

    key = jax.random.PRNGKey(0)
    kx, k1, k2 = jax.random.split(key, 3)

    x = jax.random.normal(kx, (B, C, H, W), dtype=jnp.float32)

    # Deterministic kaiming-uniform-style init (gain sqrt(2) for ReLU),
    # matching reset_parameters (fan_out for fc1, fan_in for fc2 -> both = neck).
    bound = (2.0 ** 0.5) * (3.0 / neck) ** 0.5
    fc1_weight = jax.random.uniform(k1, (neck, C), jnp.float32, -bound, bound)
    fc2_weight = jax.random.uniform(k2, (C, neck), jnp.float32, -bound, bound)

    # 1) f32, lane-aligned spatial size (16*16 = 256).
    out = jax.block_until_ready(channel_attention(x, fc1_weight, fc2_weight))
    ref = _reference(x, fc1_weight, fc2_weight)
    assert out.shape == (B, C, H, W)
    assert jnp.allclose(out, ref, atol=1e-5, rtol=1e-5), "f32 mismatch vs reference"

    # 2) Non-128-aligned spatial size (14*14 = 196) — exercises the no-pad ragged path.
    x_odd = jax.random.normal(jax.random.PRNGKey(1), (B, C, 14, 14), dtype=jnp.float32)
    out_odd = jax.block_until_ready(channel_attention(x_odd, fc1_weight, fc2_weight))
    ref_odd = _reference(x_odd, fc1_weight, fc2_weight)
    assert jnp.allclose(out_odd, ref_odd, atol=1e-5, rtol=1e-5), "ragged-HW mismatch"

    # 3) bf16 input (halved HBM traffic); pooling/MLP stay in f32.
    x_bf16 = x.astype(jnp.bfloat16)
    out_bf16 = jax.block_until_ready(channel_attention(x_bf16, fc1_weight, fc2_weight))
    ref_bf16 = _reference(x_bf16.astype(jnp.float32), fc1_weight, fc2_weight)
    assert out_bf16.dtype == jnp.bfloat16
    assert jnp.allclose(out_bf16.astype(jnp.float32), ref_bf16, atol=2e-2, rtol=2e-2), \
        "bf16 mismatch vs reference"

    print("KERNEL_OK")
</pallas_src>

<mosaic_0001>
module attributes {stable_mosaic.version = 11 : i64} {
  func.func @channel_attention_kernel(%arg0: i32, %arg1: memref<1x32x256xf32, #tpu.memory_space<vmem>>, %arg2: memref<8x32xf32, #tpu.memory_space<vmem>>, %arg3: memref<32x8xf32, #tpu.memory_space<vmem>>, %arg4: memref<1x32x256xf32, #tpu.memory_space<vmem>>) attributes {dimension_semantics = [#tpu.dimension_semantics<parallel>], iteration_bounds = array<i64: 2>, scalar_prefetch = 0 : i64, scratch_operands = 0 : i64, tpu.core_type = #tpu.core_type<tc>, window_params = [{transform_indices = @transform_0, window_bounds = array<i64: 1, 32, 256>}, {pipeline_mode = #tpu.pipeline_mode<synchronous>, transform_indices = @transform_1, window_bounds = array<i64: 8, 32>}, {pipeline_mode = #tpu.pipeline_mode<synchronous>, transform_indices = @transform_2, window_bounds = array<i64: 32, 8>}, {transform_indices = @transform_3, window_bounds = array<i64: 1, 32, 256>}]} {
    %c0 = arith.constant 0 : index
    %c0_0 = arith.constant 0 : index
    %c0_1 = arith.constant 0 : index
    %0 = vector.load %arg1[%c0, %c0_0, %c0_1] : memref<1x32x256xf32, #tpu.memory_space<vmem>>, vector<1x32x256xf32>
    %cst = arith.constant dense<0.000000e+00> : vector<1x32xf32>
    %1 = vector.multi_reduction <add>, %0, %cst [2] : vector<1x32x256xf32> to vector<1x32xf32>
    %cst_2 = arith.constant 3.906250e-03 : f32
    %2 = vector.broadcast %cst_2 : f32 to vector<1x32xf32>
    %3 = arith.mulf %1, %2 : vector<1x32xf32>
    %cst_3 = arith.constant dense<0xFF800000> : vector<1x32xf32>
    %4 = vector.multi_reduction <maximumf>, %0, %cst_3 [2] : vector<1x32x256xf32> to vector<1x32xf32>
    %5 = tpu.concatenate %3, %4 in 0 : vector<1x32xf32>, vector<1x32xf32> -> vector<2x32xf32>
    %c0_4 = arith.constant 0 : index
    %c0_5 = arith.constant 0 : index
    %6 = vector.load %arg2[%c0_4, %c0_5] : memref<8x32xf32, #tpu.memory_space<vmem>>, vector<8x32xf32>
    %c0_6 = arith.constant 0 : index
    %c0_7 = arith.constant 0 : index
    %7 = vector.load %arg3[%c0_6, %c0_7] : memref<32x8xf32, #tpu.memory_space<vmem>>, vector<32x8xf32>
    %cst_8 = arith.constant dense<0.000000e+00> : vector<2x8xf32>
    %8 = tpu.matmul %5, %6, %cst_8 {dimension_numbers = #tpu.dot_dimension_numbers<[1], [1], [0], [0], [0, 0, 1, 0], [], []>} : vector<2x32xf32>, vector<8x32xf32>, vector<2x8xf32> -> vector<2x8xf32>
    %cst_9 = arith.constant 0.000000e+00 : f32
    %9 = vector.broadcast %cst_9 : f32 to vector<2x8xf32>
    %10 = arith.maximumf %8, %9 : vector<2x8xf32>
    %cst_10 = arith.constant dense<0.000000e+00> : vector<2x32xf32>
    %11 = tpu.matmul %10, %7, %cst_10 {dimension_numbers = #tpu.dot_dimension_numbers<[1], [1], [0], [0], [0, 0, 1, 0], [], []>} : vector<2x8xf32>, vector<32x8xf32>, vector<2x32xf32> -> vector<2x32xf32>
    %12 = vector.extract_strided_slice %11 {offsets = [0, 0], sizes = [1, 32], strides = [1, 1]} : vector<2x32xf32> to vector<1x32xf32>
    %13 = vector.extract_strided_slice %11 {offsets = [1, 0], sizes = [1, 32], strides = [1, 1]} : vector<2x32xf32> to vector<1x32xf32>
    %14 = arith.addf %12, %13 : vector<1x32xf32>
    %15 = arith.negf %14 : vector<1x32xf32>
    %16 = math.exp %15 : vector<1x32xf32>
    %cst_11 = arith.constant 1.000000e+00 : f32
    %17 = vector.broadcast %cst_11 : f32 to vector<1x32xf32>
    %18 = arith.addf %17, %16 : vector<1x32xf32>
    %19 = arith.divf %17, %18 : vector<1x32xf32>
    %20 = vector.shape_cast %19 : vector<1x32xf32> to vector<1x32x1xf32>
    %21 = vector.broadcast %20 : vector<1x32x1xf32> to vector<1x32x256xf32>
    %22 = arith.mulf %0, %21 : vector<1x32x256xf32>
    %c0_12 = arith.constant 0 : index
    %c0_13 = arith.constant 0 : index
    %c0_14 = arith.constant 0 : index
    %23 = vector.load %arg4[%c0_12, %c0_13, %c0_14] : memref<1x32x256xf32, #tpu.memory_space<vmem>>, vector<1x32x256xf32>
    tpu.vector_store %arg4[%c0_12, %c0_13, %c0_14], %22 {strides = array<i32>} : memref<1x32x256xf32, #tpu.memory_space<vmem>>, vector<1x32x256xf32>,
    return
  }
  func.func @transform_0(%arg0: i32) -> (i32, i32, i32) {
    %c0_i32 = arith.constant 0 : i32
    %c0_i32_0 = arith.constant 0 : i32
    %c0_i32_1 = arith.constant 0 : i32
    return %arg0, %c0_i32, %c0_i32_0 : i32, i32, i32
  }
  func.func @transform_1(%arg0: i32) -> (i32, i32) {
    %c0_i32 = arith.constant 0 : i32
    %c0_i32_0 = arith.constant 0 : i32
    %c0_i32_1 = arith.constant 0 : i32
    return %c0_i32, %c0_i32_0 : i32, i32
  }
  func.func @transform_2(%arg0: i32) -> (i32, i32) {
    %c0_i32 = arith.constant 0 : i32
    %c0_i32_0 = arith.constant 0 : i32
    %c0_i32_1 = arith.constant 0 : i32
    return %c0_i32, %c0_i32_0 : i32, i32
  }
  func.func @transform_3(%arg0: i32) -> (i32, i32, i32) {
    %c0_i32 = arith.constant 0 : i32
    %c0_i32_0 = arith.constant 0 : i32
    %c0_i32_1 = arith.constant 0 : i32
    return %arg0, %c0_i32, %c0_i32_0 : i32, i32, i32
  }
}

</mosaic_0001>

<llo_original>
// kernel: tpu_custom_call.1
$region0: #{tpu_custom_call.1}
  #allocation0 [shape = 'u32[]', space=smem, size = 0x4, offset = 0x4, fixed_abs, tag = 'smem constant byte address 0x4 - core index']
  #allocation1 [shape = 'u32[144,128]{1,0:T(1,128)}', space=vmem, size = 0x12000, scoped, tag = 'internal scratch']
  %s0 = inlined_call_operand.hbm [shape: f32[2,32,256], index: 0, kind: input, shape index: {}]
  %s1 = inlined_call_operand.vmem [shape: f32[8,32], index: 1, kind: input, shape index: {}]
  %s2 = inlined_call_operand.vmem [shape: f32[32,8], index: 2, kind: input, shape index: {}]
  %s3 = inlined_call_operand.hbm [shape: f32[2,32,256], index: 3, kind: output, shape index: {}]
  %s4 = sld [smem:[#allocation0]]
  $region49: #{tpu_custom_call.1} parent=0
    _
  %s6 = ssub.s32 1, %s4
  %s7 = scalar_select 0, %s6, %s4
  $region1: #{tpu_custom_call.1} parent=0
    #allocation2 [shape = 'u8[65536]{0}', space=vmem, size = 0x10000, scoped, tag = 'input window, operand 0']
    #allocation3 [shape = 's32[2]{0}', space=sflag, size = 0x8, scoped, tag = 'scoped memory for tpu_custom_call.1']
    #allocation4 [shape = 's32[2]{0}', space=sflag, size = 0x8, scoped, tag = 'scoped memory for tpu_custom_call.1']
    #allocation5 [shape = 'u8[65536]{0}', space=vmem, size = 0x10000, scoped, tag = 'output window, operand 0']
    %8 = vsyncpa [#allocation3], 0
    %s9 = scalar_lea.sflag [#allocation3], 1
    %10 = vsyncpa %s9, 0
    %11 = vsyncpa [#allocation4], 0
    %s12 = scalar_lea.sflag [#allocation4], 1
    %13 = vsyncpa %s12, 0
    loop: start=0, step=1, limit=4
    $region2: #{tpu_custom_call.1} parent=1 // loop_pre_header
      _
    $region3: #{tpu_custom_call.1} parent=1 // loop_header
      %s15 = sphi 0, %s19
      %p16 = scmp.ge.s32.totalorder %s15, 4
      %s25 = sphi 0, %s27
      %s28 = sphi 0, %s25
      %s29 = sphi 0, %s28
      %s45 = sphi 0, %s29
      %s49 = sphi 0, %s49
      %s51 = sphi 0, %s49
      %s52 = sphi 0, %s51
      %s66 = sphi 0, %s52
      %s70 = sphi 0, %s70
      %s72 = sphi 0, %s70
      %s73 = sphi 0, %s72
      %s87 = sphi 0, %s73
      %s93 = sphi 0, %s95
      %s96 = sphi 0, %s93
      %s97 = sphi 0, %s96
      %s113 = sphi 0, %s97
    $region4: #{tpu_custom_call.1} parent=1 // loop_header_branch
      %18 = sbr.rel (%p16) target = $region8
    $region5: #{tpu_custom_call.1} parent=1 // loop_body
      %s20 = ssub.s32 %s15, 1
      %s21 = ssub.s32 %s15, 2
      %s22 = sadd.s32 %s15, 1
      %s23 = ssub.s32 %s15, %s22
      %p24 = scmp.eq.s32.totalorder %s23, 0
      %s26 = sadd.s32 %s25, 1
      %s27 = scalar_select %p24, %s25, %s26
      %p30 = pneg %p24
      %p31 = scmp.eq.s32.totalorder %s15, 1
      %p32 = por %p30, %p31
      %p33 = scmp.ne.s32.totalorder %s25, %s28
      %p34 = scmp.eq.s32.totalorder %s15, 0
      %p35 = por %p33, %p34
      %p36 = scmp.ne.s32.totalorder %s25, %s28
      %p37 = scmp.eq.s32.totalorder %s20, 1
      %p38 = por %p36, %p37
      %p39 = scmp.ne.s32.totalorder %s28, %s29
      %p40 = scmp.eq.s32.totalorder %s20, 0
      %p41 = por %p39, %p40
      %p42 = scmp.ne.s32.totalorder %s28, %s29
      %p43 = scmp.eq.s32.totalorder %s21, 1
      %p44 = por %p42, %p43
      %p46 = scmp.ne.s32.totalorder %s29, %s45
      %p47 = scmp.eq.s32.totalorder %s21, 0
      %p48 = por %p46, %p47
      %s50 = sadd.s32 %s49, 1
      %p53 = scmp.eq.s32.totalorder %s15, 1
      %p54 = scmp.ne.s32.totalorder %s49, %s51
      %p55 = scmp.eq.s32.totalorder %s15, 0
      %p56 = por %p54, %p55
      %p57 = scmp.ne.s32.totalorder %s49, %s51
      %p58 = scmp.eq.s32.totalorder %s20, 1
      %p59 = por %p57, %p58
      %p60 = scmp.ne.s32.totalorder %s51, %s52
      %p61 = scmp.eq.s32.totalorder %s20, 0
      %p62 = por %p60, %p61
      %p63 = scmp.ne.s32.totalorder %s51, %s52
      %p64 = scmp.eq.s32.totalorder %s21, 1
      %p65 = por %p63, %p64
      %p67 = scmp.ne.s32.totalorder %s52, %s66
      %p68 = scmp.eq.s32.totalorder %s21, 0
      %p69 = por %p67, %p68
      %s71 = sadd.s32 %s70, 1
      %p74 = scmp.eq.s32.totalorder %s15, 1
      %p75 = scmp.ne.s32.totalorder %s70, %s72
      %p76 = scmp.eq.s32.totalorder %s15, 0
      %p77 = por %p75, %p76
      %p78 = scmp.ne.s32.totalorder %s70, %s72
      %p79 = scmp.eq.s32.totalorder %s20, 1
      %p80 = por %p78, %p79
      %p81 = scmp.ne.s32.totalorder %s72, %s73
      %p82 = scmp.eq.s32.totalorder %s20, 0
      %p83 = por %p81, %p82
      %p84 = scmp.ne.s32.totalorder %s72, %s73
      %p85 = scmp.eq.s32.totalorder %s21, 1
      %p86 = por %p84, %p85
      %p88 = scmp.ne.s32.totalorder %s73, %s87
      %p89 = scmp.eq.s32.totalorder %s21, 0
      %p90 = por %p88, %p89
      %s91 = ssub.s32 %s15, %s22
      %p92 = scmp.eq.s32.totalorder %s91, 0
      %s94 = sadd.s32 %s93, 1
      %s95 = scalar_select %p92, %s93, %s94
      %p98 = pneg %p92
      %p99 = scmp.eq.s32.totalorder %s15, 1
      %p100 = por %p98, %p99
      %p101 = scmp.ne.s32.totalorder %s93, %s96
      %p102 = scmp.eq.s32.totalorder %s15, 0
      %p103 = por %p101, %p102
      %p104 = scmp.ne.s32.totalorder %s93, %s96
      %p105 = scmp.eq.s32.totalorder %s20, 1
      %p106 = por %p104, %p105
      %p107 = scmp.ne.s32.totalorder %s96, %s97
      %p108 = scmp.eq.s32.totalorder %s20, 0
      %p109 = por %p107, %p108
      %p110 = scmp.ne.s32.totalorder %s96, %s97
      %p111 = scmp.eq.s32.totalorder %s21, 1
      %p112 = por %p110, %p111
      %p114 = scmp.ne.s32.totalorder %s97, %s113
      %p115 = scmp.eq.s32.totalorder %s21, 0
      %p116 = por %p114, %p115
      %p117 = scmp.le.s32.totalorder 1, %s15
      %p118 = scmp.lt.s32.totalorder %s15, 3
      %p119 = pnand %p117, %p118
      %p120 = pneg %p119
      // Predicated region
      $region9: #{tpu_custom_call.1} parent=5 // pred_check
        _
      $region10: #{tpu_custom_call.1} parent=5 // pred_check_branch
        %122 = sbr.rel (%p119) target = $region12
      $region11: #{tpu_custom_call.1} parent=5 // pred_region
        %s123 = ssub.s32 %s15, 1
        // Predicated region
        $region13: #{tpu_custom_call.1} parent=11 // pred_check
          %p124 = pneg %p62
        $region14: #{tpu_custom_call.1} parent=11 // pred_check_branch
          %126 = sbr.rel (%p124) target = $region16
        $region15: #{tpu_custom_call.1} parent=11 // pred_region
          _
        $region16: #{tpu_custom_call.1} parent=11 // pred_fallthru
          _
        // Predicated region
        $region17: #{tpu_custom_call.1} parent=11 // pred_check
          %p127 = pneg %p83
        $region18: #{tpu_custom_call.1} parent=11 // pred_check_branch
          %129 = sbr.rel (%p127) target = $region20
        $region19: #{tpu_custom_call.1} parent=11 // pred_region
          _
        $region20: #{tpu_custom_call.1} parent=11 // pred_fallthru
          _
      $region12: #{tpu_custom_call.1} parent=5 // pred_fallthru
        _
      %p130 = scmp.lt.s32.totalorder %s15, 2
      // Predicated region
      $region21: #{tpu_custom_call.1} parent=5 // pred_check
        %p131 = pneg %p130
      $region22: #{tpu_custom_call.1} parent=5 // pred_check_branch
        %133 = sbr.rel (%p131) target = $region24
      $region23: #{tpu_custom_call.1} parent=5 // pred_region
        // Predicated region
        $region25: #{tpu_custom_call.1} parent=23 // pred_check
          %p134 = pneg %p35
        $region26: #{tpu_custom_call.1} parent=23 // pred_check_branch
          %136 = sbr.rel (%p134) target = $region28
        $region27: #{tpu_custom_call.1} parent=23 // pred_region
          %s137 = sand.u32 %s25, 1
          %s138 = scalar_lea.sflag [#allocation3], %s137
          %s139 = sand.u32 %s25, 1
          %s140 = smul.addr %s139, 64
          %s141 = scalar_lea.vmem [#allocation2], %s140
          %s143 = ssub.s32 1024, 1024
          %144 = vsyncadd %s138, %s143
          %s145 = smul.addr %s15, 8
          %s146 = smul.addr %s145, 128
          %s147 = scalar_lea.hbm %s0, %s146
          %s148 = sshll.u32 %s141, 4
          %s149 = int_to_ptr.vmem [resolvable:$true] %s148
          %154 = dma.hbm_to_vmem [thread:$0]  %s147, 1024, %s149, %s138, 256, 256, 16
        $region28: #{tpu_custom_call.1} parent=23 // pred_fallthru
          _
      $region24: #{tpu_custom_call.1} parent=5 // pred_fallthru
        _
      %p155 = scmp.le.s32.totalorder 1, %s15
      %p156 = scmp.lt.s32.totalorder %s15, 3
      %p157 = pnand %p155, %p156
      %p158 = pneg %p157
      // Predicated region
      $region29: #{tpu_custom_call.1} parent=5 // pred_check
        _
      $region30: #{tpu_custom_call.1} parent=5 // pred_check_branch
        %160 = sbr.rel (%p157) target = $region32
      $region31: #{tpu_custom_call.1} parent=5 // pred_region
        %s161 = ssub.s32 %s15, 1
        %s162 = sand.u32 %s28, 1
        %s163 = scalar_lea.sflag [#allocation3], %s162
        %s164 = sand.u32 %s28, 1
        %s165 = smul.addr %s164, 64
        %s166 = scalar_lea.vmem [#allocation2], %s165
        // Predicated region
        $region33: #{tpu_custom_call.1} parent=31 // pred_check
          %p167 = pneg %p41
        $region34: #{tpu_custom_call.1} parent=31 // pred_check_branch
          %169 = sbr.rel (%p167) target = $region36
        $region35: #{tpu_custom_call.1} parent=31 // pred_region
          %170 = dma.done %s163, 1024
        $region36: #{tpu_custom_call.1} parent=31 // pred_fallthru
          _
        %s171 = sand.u32 %s28, 1
        %s172 = scalar_lea.sflag [#allocation3], %s171
        %s173 = sand.u32 %s28, 1
        %s174 = smul.addr %s173, 64
        %s175 = scalar_lea.vmem [#allocation2], %s174
        %p176 = pneg %p41
        %p177 = pneg %p38
        %p178 = pneg %p62
        %p179 = pneg %p59
        %p180 = pneg %p83
        %p181 = pneg %p80
        %p182 = pneg %p109
        %p183 = pneg %p106
        %s184 = sand.u32 %s96, 1
        %s185 = scalar_lea.sflag [#allocation4], %s184
        %s186 = sand.u32 %s96, 1
        %s187 = smul.addr %s186, 64
        %s188 = scalar_lea.vmem [#allocation5], %s187
        %v189 = vld [vmem:[%s166] sm:$0xff]
        %v190 = vld [vmem:[%s166 + $0x8] sm:$0xff]
        %v191 = vld [vmem:[%s166 + $0x10] sm:$0xff]
        %v192 = vld [vmem:[%s166 + $0x18] sm:$0xff]
        %v193 = vld [vmem:[%s166 + $0x20] sm:$0xff]
        %v194 = vld [vmem:[%s166 + $0x28] sm:$0xff]
        %v195 = vld [vmem:[%s166 + $0x30] sm:$0xff]
        %v196 = vld [vmem:[%s166 + $0x38] sm:$0xff]
        %v197 = vadd.f32 %v189, %v190
        %198 = vadd.xlane.f32.xlu0 %v197
        %v199 = vpop.xlane.xlu0 %198
        %v200 = vadd.f32 %v191, %v192
        %201 = vadd.xlane.f32.xlu0 %v200
        %v202 = vpop.xlane.xlu0 %201
        %v203 = vadd.f32 %v193, %v194
        %204 = vadd.xlane.f32.xlu0 %v203
        %v205 = vpop.xlane.xlu0 %204
        %v206 = vadd.f32 %v195, %v196
        %207 = vadd.xlane.f32.xlu0 %v206
        %v208 = vpop.xlane.xlu0 %207
        %v209 = vmul.f32 %v199, 0.00390625
        %v210 = vmul.f32 %v202, 0.00390625
        %v211 = vmul.f32 %v205, 0.00390625
        %v212 = vmul.f32 %v208, 0.00390625
        %v213 = vmax.f32 %v189, %v190
        %214 = vmax.xlane.f32.xlu0 %v213
        %v215 = vpop.xlane.xlu0 %214
        %v216 = vmax.f32 %v191, %v192
        %217 = vmax.xlane.f32.xlu0 %v216
        %v218 = vpop.xlane.xlu0 %217
        %v219 = vmax.f32 %v193, %v194
        %220 = vmax.xlane.f32.xlu0 %v219
        %v221 = vpop.xlane.xlu0 %220
        %v222 = vmax.f32 %v195, %v196
        %223 = vmax.xlane.f32.xlu0 %v222
        %v224 = vpop.xlane.xlu0 %223
        %v229 = vlaneseq
        %v230 = vand.u32 %v229, 127
        %v231 = vlaneseq
        %v232 = vshrl.u32 %v231, 7
        %v233 = vsub.s32 %v230, %v232
        %v234 = vrot.slane %v209, %v233
        %v235 = vadd.s32 %v230, 4294967288
        %v236 = vlaneseq
        %v237 = vshrl.u32 %v236, 7
        %v238 = vsub.s32 %v235, %v237
        %v239 = vrot.slane %v210, %v238
        %vm240 = vcmask 130112
        %v241 = vsel %vm240, %v239, %v234
        %v242 = vadd.s32 %v230, 4294967280
        %v243 = vlaneseq
        %v244 = vshrl.u32 %v243, 7
        %v245 = vsub.s32 %v242, %v244
        %v246 = vrot.slane %v211, %v245
        %vm247 = vcmask 195712
        %v248 = vsel %vm247, %v246, %v241
        %v249 = vadd.s32 %v230, 4294967272
        %v250 = vlaneseq
        %v251 = vshrl.u32 %v250, 7
        %v252 = vsub.s32 %v249, %v251
        %v253 = vrot.slane %v212, %v252
        %vm254 = vcmask 261312
        %v255 = vsel %vm254, %v253, %v248
        %v261 = vlaneseq
        %v262 = vshrl.u32 %v261, 7
        %v263 = vsub.s32 %v230, %v262
        %v264 = vrot.slane %v215, %v263
        %v265 = vlaneseq
        %v266 = vshrl.u32 %v265, 7
        %v267 = vsub.s32 %v235, %v266
        %v268 = vrot.slane %v218, %v267
        %v269 = vsel %vm240, %v268, %v264
        %v270 = vlaneseq
        %v271 = vshrl.u32 %v270, 7
        %v272 = vsub.s32 %v242, %v271
        %v273 = vrot.slane %v221, %v272
        %v274 = vsel %vm247, %v273, %v269
        %v275 = vlaneseq
        %v276 = vshrl.u32 %v275, 7
        %v277 = vsub.s32 %v249, %v276
        %v278 = vrot.slane %v224, %v277
        %v279 = vsel %vm254, %v278, %v274
        %vm281 = vcmask 1040384
        %v282 = vsel %vm281, %v255, %v279
        %v283 = vld [vmem:[%s1] sm:$0xff]
        %v284 = vld [vmem:[%s2] sm:$0xff]
        %v285 = vld [vmem:[%s2 + $0x8] sm:$0xff]
        %v286 = vld [vmem:[%s2 + $0x10] sm:$0xff]
        %v287 = vld [vmem:[%s2 + $0x18] sm:$0xff]
        %vm288 = vcmask 261120
        %v290 = vsel %vm288, %v282, 0
        %v293 = vsel %vm288, %v283, 0
        %295 = vmatprep.subr.mxu0 0.0
        %296 = vmatpush1.xpose.msra.mxu0 %v293
        %297 = vmatprep.subr.mxu0 0.0
        %298 = vmatpush1.xpose.msra.mxu0 0.0
        %299 = vmatprep.subr.mxu0 0.0
        %300 = vmatpush1.xpose.msra.mxu0 0.0
        %301 = vmatprep.subr.mxu0 0.0
        %302 = vmatpush1.xpose.msra.mxu0 0.0
        %303 = vmatprep.subr.mxu0 0.0
        %304 = vmatpush1.xpose.msra.mxu0 0.0
        %305 = vmatprep.subr.mxu0 0.0
        %306 = vmatpush1.xpose.msra.mxu0 0.0
        %307 = vmatprep.subr.mxu0 0.0
        %308 = vmatpush1.xpose.msra.mxu0 0.0
        %309 = vmatprep.subr.mxu0 0.0
        %310 = vmatpush1.xpose.msra.mxu0 0.0
        %311 = vmatprep.subr.mxu0 0.0
        %312 = vmatpush1.xpose.msra.mxu0 0.0
        %313 = vmatprep.subr.mxu0 0.0
        %314 = vmatpush1.xpose.msra.mxu0 0.0
        %315 = vmatprep.subr.mxu0 0.0
        %316 = vmatpush1.xpose.msra.mxu0 0.0
        %317 = vmatprep.subr.mxu0 0.0
        %318 = vmatpush1.xpose.msra.mxu0 0.0
        %319 = vmatprep.subr.mxu0 0.0
        %320 = vmatpush1.xpose.msra.mxu0 0.0
        %321 = vmatprep.subr.mxu0 0.0
        %322 = vmatpush1.xpose.msra.mxu0 0.0
        %323 = vmatprep.subr.mxu0 0.0
        %324 = vmatpush1.xpose.msra.mxu0 0.0
        %325 = vmatprep.subr.mxu0 0.0
        %326 = vmatpush1.xpose.msra.mxu0 0.0
        %327 = vmatprep.subr.mxu0 0.0
        %328 = vmatpush1.xpose.msra.mxu0 0.0
        %329 = vmatprep.subr.mxu0 0.0
        %330 = vmatpush1.xpose.msra.mxu0 0.0
        %331 = vmatprep.subr.mxu0 0.0
        %332 = vmatpush1.xpose.msra.mxu0 0.0
        %333 = vmatprep.subr.mxu0 0.0
        %334 = vmatpush1.xpose.msra.mxu0 0.0
        %335 = vmatprep.subr.mxu0 0.0
        %336 = vmatpush1.xpose.msra.mxu0 0.0
        %337 = vmatprep.subr.mxu0 0.0
        %338 = vmatpush1.xpose.msra.mxu0 0.0
        %339 = vmatprep.subr.mxu0 0.0
        %340 = vmatpush1.xpose.msra.mxu0 0.0
        %341 = vmatprep.subr.mxu0 0.0
        %342 = vmatpush1.xpose.msra.mxu0 0.0
        %343 = vmatprep.subr.mxu0 0.0
        %344 = vmatpush1.xpose.msra.mxu0 0.0
        %345 = vmatprep.subr.mxu0 0.0
        %346 = vmatpush1.xpose.msra.mxu0 0.0
        %347 = vmatprep.subr.mxu0 0.0
        %348 = vmatpush1.xpose.msra.mxu0 0.0
        %349 = vmatprep.subr.mxu0 0.0
        %350 = vmatpush1.xpose.msra.mxu0 0.0
        %351 = vmatprep.subr.mxu0 0.0
        %352 = vmatpush1.xpose.msra.mxu0 0.0
        %353 = vmatprep.subr.mxu0 0.0
        %354 = vmatpush1.xpose.msra.mxu0 0.0
        %355 = vmatprep.subr.mxu0 0.0
        %356 = vmatpush1.xpose.msra.mxu0 0.0
        %357 = vmatprep.subr.mxu0 0.0
        %358 = vmatpush1.xpose.msra.mxu0 0.0
        %359 = vmatprep.mubr.f32.mxu0 0.0
        %360 = vmatmul.mubr.f32.gmra.mrb[0].mxu0 %v290
        %v361 = vpop.f32.mrb[0].mxu0
        %v362 = vadd.f32 0.0, %v361
        %v363 = vpop.f32.mrb[0].mxu0
        %364 = vdwg.mxu0
        %v365 = vmax.f32 %v362, 0.0
        %vm366 = vcmask 64512
        %v368 = vsel %vm366, %v365, 0
        %v371 = vsel %vm366, %v284, 0
        %v374 = vsel %vm366, %v285, 0
        %v377 = vsel %vm366, %v286, 0
        %v380 = vsel %vm366, %v287, 0
        %382 = vmatprep.subr.mxu0 0.0
        %383 = vmatpush1.xpose.msra.mxu0 %v371
        %384 = vmatprep.subr.mxu0 0.0
        %385 = vmatpush1.xpose.msra.mxu0 %v374
        %386 = vmatprep.subr.mxu0 0.0
        %387 = vmatpush1.xpose.msra.mxu0 %v377
        %388 = vmatprep.subr.mxu0 0.0
        %389 = vmatpush1.xpose.msra.mxu0 %v380
        %390 = vmatprep.subr.mxu0 0.0
        %391 = vmatpush1.xpose.msra.mxu0 0.0
        %392 = vmatprep.subr.mxu0 0.0
        %393 = vmatpush1.xpose.msra.mxu0 0.0
        %394 = vmatprep.subr.mxu0 0.0
        %395 = vmatpush1.xpose.msra.mxu0 0.0
        %396 = vmatprep.subr.mxu0 0.0
        %397 = vmatpush1.xpose.msra.mxu0 0.0
        %398 = vmatprep.subr.mxu0 0.0
        %399 = vmatpush1.xpose.msra.mxu0 0.0
        %400 = vmatprep.subr.mxu0 0.0
        %401 = vmatpush1.xpose.msra.mxu0 0.0
        %402 = vmatprep.subr.mxu0 0.0
        %403 = vmatpush1.xpose.msra.mxu0 0.0
        %404 = vmatprep.subr.mxu0 0.0
        %405 = vmatpush1.xpose.msra.mxu0 0.0
        %406 = vmatprep.subr.mxu0 0.0
        %407 = vmatpush1.xpose.msra.mxu0 0.0
        %408 = vmatprep.subr.mxu0 0.0
        %409 = vmatpush1.xpose.msra.mxu0 0.0
        %410 = vmatprep.subr.mxu0 0.0
        %411 = vmatpush1.xpose.msra.mxu0 0.0
        %412 = vmatprep.subr.mxu0 0.0
        %413 = vmatpush1.xpose.msra.mxu0 0.0
        %414 = vmatprep.subr.mxu0 0.0
        %415 = vmatpush1.xpose.msra.mxu0 0.0
        %416 = vmatprep.subr.mxu0 0.0
        %417 = vmatpush1.xpose.msra.mxu0 0.0
        %418 = vmatprep.subr.mxu0 0.0
        %419 = vmatpush1.xpose.msra.mxu0 0.0
        %420 = vmatprep.subr.mxu0 0.0
        %421 = vmatpush1.xpose.msra.mxu0 0.0
        %422 = vmatprep.subr.mxu0 0.0
        %423 = vmatpush1.xpose.msra.mxu0 0.0
        %424 = vmatprep.subr.mxu0 0.0
        %425 = vmatpush1.xpose.msra.mxu0 0.0
        %426 = vmatprep.subr.mxu0 0.0
        %427 = vmatpush1.xpose.msra.mxu0 0.0
        %428 = vmatprep.subr.mxu0 0.0
        %429 = vmatpush1.xpose.msra.mxu0 0.0
        %430 = vmatprep.subr.mxu0 0.0
        %431 = vmatpush1.xpose.msra.mxu0 0.0
        %432 = vmatprep.subr.mxu0 0.0
        %433 = vmatpush1.xpose.msra.mxu0 0.0
        %434 = vmatprep.subr.mxu0 0.0
        %435 = vmatpush1.xpose.msra.mxu0 0.0
        %436 = vmatprep.subr.mxu0 0.0
        %437 = vmatpush1.xpose.msra.mxu0 0.0
        %438 = vmatprep.subr.mxu0 0.0
        %439 = vmatpush1.xpose.msra.mxu0 0.0
        %440 = vmatprep.subr.mxu0 0.0
        %441 = vmatpush1.xpose.msra.mxu0 0.0
        %442 = vmatprep.subr.mxu0 0.0
        %443 = vmatpush1.xpose.msra.mxu0 0.0
        %444 = vmatprep.subr.mxu0 0.0
        %445 = vmatpush1.xpose.msra.mxu0 0.0
        %446 = vmatprep.mubr.f32.mxu0 0.0
        %447 = vmatmul.mubr.f32.gmra.mrb[0].mxu0 %v368
        %v448 = vpop.f32.mrb[0].mxu0
        %v449 = vadd.f32 0.0, %v448
        %v450 = vpop.f32.mrb[0].mxu0
        %451 = vdwg.mxu0
        %v453 = vrot.slane %v449, 1
        %v455 = vadd.f32 %v449, %v453
        %v456 = vxor.u32 %v455, 2147483648
        %v457 = vmul.f32 %v456, 1.442695
        %v458 = vpow.pop %v457
        %v459 = vadd.f32 %v458, 1.0
        %v460 = vrcp.pop %v459
        %v461 = vmul.f32 1.0, %v460
        %v462 = vlaneseq
        %v463 = vshrl.u32 %v462, 7
        %v464 = vsub.s32 0, %v463
        %v465 = vrot.slane %v461, %v464
        %467 = vbcast.lane.b32.xlu0 %v465, 256
        %v468 = vpop.permute.xlu0 %467
        %s470 = sor.u32 256, 8
        %471 = vbcast.lane.b32.xlu0 %v465, %s470
        %v472 = vpop.permute.xlu0 %471
        %s474 = sor.u32 256, 16
        %475 = vbcast.lane.b32.xlu0 %v465, %s474
        %v476 = vpop.permute.xlu0 %475
        %s478 = sor.u32 256, 24
        %479 = vbcast.lane.b32.xlu0 %v465, %s478
        %v480 = vpop.permute.xlu0 %479
        %v481 = vmul.f32 %v189, %v468
        %v482 = vmul.f32 %v190, %v468
        %v483 = vmul.f32 %v191, %v472
        %v484 = vmul.f32 %v192, %v472
        %v485 = vmul.f32 %v193, %v476
        %v486 = vmul.f32 %v194, %v476
        %v487 = vmul.f32 %v195, %v480
        %v488 = vmul.f32 %v196, %v480
        %489 = vst [vmem:[%s188] sm:$0xff] %v481
        %490 = vst [vmem:[%s188 + $0x8] sm:$0xff] %v482
        %491 = vst [vmem:[%s188 + $0x10] sm:$0xff] %v483
        %492 = vst [vmem:[%s188 + $0x18] sm:$0xff] %v484
        %493 = vst [vmem:[%s188 + $0x20] sm:$0xff] %v485
        %494 = vst [vmem:[%s188 + $0x28] sm:$0xff] %v486
        %495 = vst [vmem:[%s188 + $0x30] sm:$0xff] %v487
        %496 = vst [vmem:[%s188 + $0x38] sm:$0xff] %v488
        %s497 = sand.u32 %s96, 1
        %s498 = scalar_lea.sflag [#allocation4], %s497
        %s499 = sand.u32 %s96, 1
        %s500 = smul.addr %s499, 64
        %s501 = scalar_lea.vmem [#allocation5], %s500
        // Predicated region
        $region37: #{tpu_custom_call.1} parent=31 // pred_check
          %p502 = pneg %p106
        $region38: #{tpu_custom_call.1} parent=31 // pred_check_branch
          %504 = sbr.rel (%p502) target = $region40
        $region39: #{tpu_custom_call.1} parent=31 // pred_region
          %s506 = ssub.s32 1024, 1024
          %507 = vsyncadd %s498, %s506
          %s508 = smul.addr %s20, 8
          %s509 = smul.addr %s508, 128
          %s510 = scalar_lea.hbm %s3, %s509
          %s511 = sshll.u32 %s501, 4
          %s512 = int_to_ptr.vmem [resolvable:$true] %s511
          %517 = dma.vmem_to_hbm [thread:$0]  %s512, 1024, %s510, %s498, 256, 256, 16
        $region40: #{tpu_custom_call.1} parent=31 // pred_fallthru
          _
      $region32: #{tpu_custom_call.1} parent=5 // pred_fallthru
        _
      %p518 = scmp.le.s32.totalorder 2, %s15
      // Predicated region
      $region41: #{tpu_custom_call.1} parent=5 // pred_check
        %p519 = pneg %p518
      $region42: #{tpu_custom_call.1} parent=5 // pred_check_branch
        %521 = sbr.rel (%p519) target = $region44
      $region43: #{tpu_custom_call.1} parent=5 // pred_region
        %s522 = ssub.s32 %s15, 2
        // Predicated region
        $region45: #{tpu_custom_call.1} parent=43 // pred_check
          %p523 = pneg %p112
        $region46: #{tpu_custom_call.1} parent=43 // pred_check_branch
          %525 = sbr.rel (%p523) target = $region48
        $region47: #{tpu_custom_call.1} parent=43 // pred_region
          %s526 = sand.u32 %s97, 1
          %s527 = scalar_lea.sflag [#allocation4], %s526
          %s528 = sand.u32 %s97, 1
          %s529 = smul.addr %s528, 64
          %s530 = scalar_lea.vmem [#allocation5], %s529
          %531 = dma.done %s527, 1024
        $region48: #{tpu_custom_call.1} parent=43 // pred_fallthru
          _
      $region44: #{tpu_custom_call.1} parent=5 // pred_fallthru
        _
    $region6: #{tpu_custom_call.1} parent=1 // loop_footer
      %s19 = sadd.s32 1, %s15
    $region7: #{tpu_custom_call.1} parent=1 // loop_footer_branch
      %14 = sbr.rel target = $region3
    $region8: #{tpu_custom_call.1} parent=1 // loop_exit
      _
    %532 = vsyncpa [#allocation3], 1
    %s533 = scalar_lea.sflag [#allocation3], 1
    %534 = vsyncpa %s533, 1
    %535 = vsyncpa [#allocation4], 1
    %s536 = scalar_lea.sflag [#allocation4], 1
    %537 = vsyncpa %s536, 1

</llo_original>
